<compile_context>
chip_gen: v5e
topology: v5e:2x2
jax: 0.10.0
libtpu: 0.0.40
codegen_flags: <defaults>
</compile_context>

<pallas_src>
import functools

import jax
import jax.numpy as jnp
from jax import lax
from jax.experimental import pallas as pl
from jax.experimental.pallas import tpu as pltpu


# ---------------------------------------------------------------------------
# Pallas kernel: fused (3x3 conv as 9 shifted MACs + bias + per-channel act)
# ---------------------------------------------------------------------------
def _conv_act_kernel(x_ref, w_ref, b_ref, o_ref, *, wp):
    # x_ref : (1, C_in, Lin)   zero-padded input, flat spatial (row stride wp)
    # w_ref : (9, C_out, C_in) conv taps, tap index k = kh*3 + kw
    # b_ref : (C_out, 1)       conv bias (broadcast over lanes)
    # o_ref : (1, C_out, Lout) output, flat index q = h*wp + w
    c_out = o_ref.shape[1]
    lout = o_ref.shape[2]

    x = x_ref[0]                                        # (C_in, Lin) in VMEM/vregs

    acc = jnp.zeros((c_out, lout), jnp.float32)
    for kh in range(3):
        for kw in range(3):
            s = kh * wp + kw                            # static lane shift
            xs = x[:, s:s + lout]                       # shifted tap, (C_in, Lout)
            wk = w_ref[kh * 3 + kw]                     # (C_out, C_in)
            acc = acc + jnp.dot(wk, xs, preferred_element_type=jnp.float32)

    acc = acc + b_ref[...]                              # (C_out,1) -> lanes

    # Per-channel activation, each evaluated only on its own sublane row.
    # Channel order matches activations = [Sigmoid, Tanh, None, ReLU].
    o_ref[0, 0:1, :] = jax.nn.sigmoid(acc[0:1, :]).astype(o_ref.dtype)
    o_ref[0, 1:2, :] = jnp.tanh(acc[1:2, :]).astype(o_ref.dtype)
    o_ref[0, 2:3, :] = acc[2:3, :].astype(o_ref.dtype)           # identity (None)
    o_ref[0, 3:4, :] = jnp.maximum(acc[3:4, :], 0.0).astype(o_ref.dtype)


# ---------------------------------------------------------------------------
# Wrapper: one cheap pad + reshape of the raw input, no transposes, no im2col
# ---------------------------------------------------------------------------
@jax.jit
def generic_forward(x_nchw, weight, bias):
    """x_nchw: (N, C_in, H, W) f32, weight: (C_out, C_in, 3, 3), bias: (C_out,)"""
    N, C_in, H, W = x_nchw.shape
    C_out, _, KH, KW = weight.shape
    assert (KH, KW) == (3, 3)
    assert C_out == 4  # activation list [sigmoid, tanh, None, relu]

    Wp = W + 2                       # width incl. SAME padding
    Hp_ext = H + 3                   # 1 top + 2 bottom zero rows (extra row keeps
                                     # the largest shifted slice in bounds)
    Lin = Hp_ext * Wp
    Lout = H * Wp                    # valid output (h, w) lives at q = h*Wp + w

    # Single pad of the RAW input (not a 9x patch tensor), NCHW layout kept.
    x_pad = jnp.pad(x_nchw, ((0, 0), (0, 0), (1, 2), (1, 1)))
    x_flat = x_pad.reshape(N, C_in, Lin)

    # (C_out, C_in, 3, 3) -> (9, C_out, C_in), tap k = kh*3 + kw (tiny constant op)
    w_taps = jnp.transpose(weight, (2, 3, 0, 1)).reshape(KH * KW, C_out, C_in)
    b_2d = bias.reshape(C_out, 1)

    kernel = functools.partial(_conv_act_kernel, wp=Wp)

    out_flat = pl.pallas_call(
        kernel,
        out_shape=jax.ShapeDtypeStruct((N, C_out, Lout), jnp.float32),
        grid_spec=pltpu.PrefetchScalarGridSpec(
            num_scalar_prefetch=0,
            grid=(N,),
            in_specs=[
                pl.BlockSpec((1, C_in, Lin), lambda n: (n, 0, 0)),        # per-sample input
                pl.BlockSpec((KH * KW, C_out, C_in), lambda n: (0, 0, 0)),  # full weights
                pl.BlockSpec((C_out, 1), lambda n: (0, 0)),               # full bias
            ],
            out_specs=pl.BlockSpec((1, C_out, Lout), lambda n: (n, 0, 0)),
        ),
        compiler_params=pltpu.CompilerParams(
            dimension_semantics=("parallel",),       # lets v7x split batch over 2 TCs
        ),
    )(x_flat, w_taps, b_2d)

    # q = h*Wp + w  ->  reshape and drop the 2 padded columns per row (already NCHW)
    out = out_flat.reshape(N, C_out, H, Wp)[:, :, :, :W]
    return out


# ---------------------------------------------------------------------------
# Pure-JAX reference (same math, no Pallas) for sanity checking
# ---------------------------------------------------------------------------
def _reference(x_nchw, weight, bias):
    y = lax.conv_general_dilated(
        x_nchw, weight, window_strides=(1, 1), padding="SAME",
        dimension_numbers=("NCHW", "OIHW", "NCHW"),
    ) + bias.reshape(1, -1, 1, 1)
    c0 = jax.nn.sigmoid(y[:, 0])
    c1 = jnp.tanh(y[:, 1])
    c2 = y[:, 2]
    c3 = jnp.maximum(y[:, 3], 0.0)
    return jnp.stack([c0, c1, c2, c3], axis=1)


if __name__ == "__main__":
    key = jax.random.PRNGKey(0)
    k_x, k_w, k_b = jax.random.split(key, 3)

    N, C_in, H, W = 2, 4, 16, 16
    C_out = 4

    x = jax.random.normal(k_x, (N, C_in, H, W), dtype=jnp.float32)
    # deterministic synthetic conv parameters (no checkpoint loading)
    weight = jax.random.normal(k_w, (C_out, C_in, 3, 3), dtype=jnp.float32) * 0.1
    bias = jax.random.normal(k_b, (C_out,), dtype=jnp.float32) * 0.1

    out = generic_forward(x, weight, bias)
    out = jax.block_until_ready(out)

    ref = _reference(x, weight, bias)
    assert out.shape == (N, C_out, H, W)
    assert jnp.allclose(out, ref, atol=1e-4, rtol=1e-4), "mismatch vs reference"

    print("KERNEL_OK")
</pallas_src>

<mosaic_0001>
module attributes {stable_mosaic.version = 11 : i64} {
  func.func @_conv_act_kernel(%arg0: i32, %arg1: memref<1x4x342xf32, #tpu.memory_space<vmem>>, %arg2: memref<9x4x4xf32, #tpu.memory_space<vmem>>, %arg3: memref<4x1xf32, #tpu.memory_space<vmem>>, %arg4: memref<1x4x288xf32, #tpu.memory_space<vmem>>) attributes {dimension_semantics = [#tpu.dimension_semantics<parallel>], iteration_bounds = array<i64: 2>, scalar_prefetch = 0 : i64, scratch_operands = 0 : i64, tpu.core_type = #tpu.core_type<tc>, window_params = [{transform_indices = @transform_0, window_bounds = array<i64: 1, 4, 342>}, {pipeline_mode = #tpu.pipeline_mode<synchronous>, transform_indices = @transform_1, window_bounds = array<i64: 9, 4, 4>}, {pipeline_mode = #tpu.pipeline_mode<synchronous>, transform_indices = @transform_2, window_bounds = array<i64: 4, 1>}, {transform_indices = @transform_3, window_bounds = array<i64: 1, 4, 288>}]} {
    %c0 = arith.constant 0 : index
    %c0_0 = arith.constant 0 : index
    %c0_1 = arith.constant 0 : index
    %0 = vector.load %arg1[%c0, %c0_0, %c0_1] : memref<1x4x342xf32, #tpu.memory_space<vmem>>, vector<1x4x342xf32>
    %1 = vector.shape_cast %0 : vector<1x4x342xf32> to vector<4x342xf32>
    %cst = arith.constant 0.000000e+00 : f32
    %2 = vector.broadcast %cst : f32 to vector<4x288xf32>
    %3 = vector.extract_strided_slice %1 {offsets = [0, 0], sizes = [4, 288], strides = [1, 1]} : vector<4x342xf32> to vector<4x288xf32>
    %c0_2 = arith.constant 0 : index
    %c0_3 = arith.constant 0 : index
    %c0_4 = arith.constant 0 : index
    %4 = vector.load %arg2[%c0_2, %c0_3, %c0_4] : memref<9x4x4xf32, #tpu.memory_space<vmem>>, vector<1x4x4xf32>
    %5 = vector.shape_cast %4 : vector<1x4x4xf32> to vector<4x4xf32>
    %cst_5 = arith.constant dense<0.000000e+00> : vector<4x288xf32>
    %6 = tpu.matmul %5, %3, %cst_5 {dimension_numbers = #tpu.dot_dimension_numbers<[1], [0], [0], [1], [0, 0, 1, 1], [], []>} : vector<4x4xf32>, vector<4x288xf32>, vector<4x288xf32> -> vector<4x288xf32>
    %7 = arith.addf %2, %6 : vector<4x288xf32>
    %8 = vector.extract_strided_slice %1 {offsets = [0, 1], sizes = [4, 288], strides = [1, 1]} : vector<4x342xf32> to vector<4x288xf32>
    %c1 = arith.constant 1 : index
    %c0_6 = arith.constant 0 : index
    %c0_7 = arith.constant 0 : index
    %9 = vector.load %arg2[%c1, %c0_6, %c0_7] : memref<9x4x4xf32, #tpu.memory_space<vmem>>, vector<1x4x4xf32>
    %10 = vector.shape_cast %9 : vector<1x4x4xf32> to vector<4x4xf32>
    %cst_8 = arith.constant dense<0.000000e+00> : vector<4x288xf32>
    %11 = tpu.matmul %10, %8, %cst_8 {dimension_numbers = #tpu.dot_dimension_numbers<[1], [0], [0], [1], [0, 0, 1, 1], [], []>} : vector<4x4xf32>, vector<4x288xf32>, vector<4x288xf32> -> vector<4x288xf32>
    %12 = arith.addf %7, %11 : vector<4x288xf32>
    %13 = vector.extract_strided_slice %1 {offsets = [0, 2], sizes = [4, 288], strides = [1, 1]} : vector<4x342xf32> to vector<4x288xf32>
    %c2 = arith.constant 2 : index
    %c0_9 = arith.constant 0 : index
    %c0_10 = arith.constant 0 : index
    %14 = vector.load %arg2[%c2, %c0_9, %c0_10] : memref<9x4x4xf32, #tpu.memory_space<vmem>>, vector<1x4x4xf32>
    %15 = vector.shape_cast %14 : vector<1x4x4xf32> to vector<4x4xf32>
    %cst_11 = arith.constant dense<0.000000e+00> : vector<4x288xf32>
    %16 = tpu.matmul %15, %13, %cst_11 {dimension_numbers = #tpu.dot_dimension_numbers<[1], [0], [0], [1], [0, 0, 1, 1], [], []>} : vector<4x4xf32>, vector<4x288xf32>, vector<4x288xf32> -> vector<4x288xf32>
    %17 = arith.addf %12, %16 : vector<4x288xf32>
    %18 = vector.extract_strided_slice %1 {offsets = [0, 18], sizes = [4, 288], strides = [1, 1]} : vector<4x342xf32> to vector<4x288xf32>
    %c3 = arith.constant 3 : index
    %c0_12 = arith.constant 0 : index
    %c0_13 = arith.constant 0 : index
    %19 = vector.load %arg2[%c3, %c0_12, %c0_13] : memref<9x4x4xf32, #tpu.memory_space<vmem>>, vector<1x4x4xf32>
    %20 = vector.shape_cast %19 : vector<1x4x4xf32> to vector<4x4xf32>
    %cst_14 = arith.constant dense<0.000000e+00> : vector<4x288xf32>
    %21 = tpu.matmul %20, %18, %cst_14 {dimension_numbers = #tpu.dot_dimension_numbers<[1], [0], [0], [1], [0, 0, 1, 1], [], []>} : vector<4x4xf32>, vector<4x288xf32>, vector<4x288xf32> -> vector<4x288xf32>
    %22 = arith.addf %17, %21 : vector<4x288xf32>
    %23 = vector.extract_strided_slice %1 {offsets = [0, 19], sizes = [4, 288], strides = [1, 1]} : vector<4x342xf32> to vector<4x288xf32>
    %c4 = arith.constant 4 : index
    %c0_15 = arith.constant 0 : index
    %c0_16 = arith.constant 0 : index
    %24 = vector.load %arg2[%c4, %c0_15, %c0_16] : memref<9x4x4xf32, #tpu.memory_space<vmem>>, vector<1x4x4xf32>
    %25 = vector.shape_cast %24 : vector<1x4x4xf32> to vector<4x4xf32>
    %cst_17 = arith.constant dense<0.000000e+00> : vector<4x288xf32>
    %26 = tpu.matmul %25, %23, %cst_17 {dimension_numbers = #tpu.dot_dimension_numbers<[1], [0], [0], [1], [0, 0, 1, 1], [], []>} : vector<4x4xf32>, vector<4x288xf32>, vector<4x288xf32> -> vector<4x288xf32>
    %27 = arith.addf %22, %26 : vector<4x288xf32>
    %28 = vector.extract_strided_slice %1 {offsets = [0, 20], sizes = [4, 288], strides = [1, 1]} : vector<4x342xf32> to vector<4x288xf32>
    %c5 = arith.constant 5 : index
    %c0_18 = arith.constant 0 : index
    %c0_19 = arith.constant 0 : index
    %29 = vector.load %arg2[%c5, %c0_18, %c0_19] : memref<9x4x4xf32, #tpu.memory_space<vmem>>, vector<1x4x4xf32>
    %30 = vector.shape_cast %29 : vector<1x4x4xf32> to vector<4x4xf32>
    %cst_20 = arith.constant dense<0.000000e+00> : vector<4x288xf32>
    %31 = tpu.matmul %30, %28, %cst_20 {dimension_numbers = #tpu.dot_dimension_numbers<[1], [0], [0], [1], [0, 0, 1, 1], [], []>} : vector<4x4xf32>, vector<4x288xf32>, vector<4x288xf32> -> vector<4x288xf32>
    %32 = arith.addf %27, %31 : vector<4x288xf32>
    %33 = vector.extract_strided_slice %1 {offsets = [0, 36], sizes = [4, 288], strides = [1, 1]} : vector<4x342xf32> to vector<4x288xf32>
    %c6 = arith.constant 6 : index
    %c0_21 = arith.constant 0 : index
    %c0_22 = arith.constant 0 : index
    %34 = vector.load %arg2[%c6, %c0_21, %c0_22] : memref<9x4x4xf32, #tpu.memory_space<vmem>>, vector<1x4x4xf32>
    %35 = vector.shape_cast %34 : vector<1x4x4xf32> to vector<4x4xf32>
    %cst_23 = arith.constant dense<0.000000e+00> : vector<4x288xf32>
    %36 = tpu.matmul %35, %33, %cst_23 {dimension_numbers = #tpu.dot_dimension_numbers<[1], [0], [0], [1], [0, 0, 1, 1], [], []>} : vector<4x4xf32>, vector<4x288xf32>, vector<4x288xf32> -> vector<4x288xf32>
    %37 = arith.addf %32, %36 : vector<4x288xf32>
    %38 = vector.extract_strided_slice %1 {offsets = [0, 37], sizes = [4, 288], strides = [1, 1]} : vector<4x342xf32> to vector<4x288xf32>
    %c7 = arith.constant 7 : index
    %c0_24 = arith.constant 0 : index
    %c0_25 = arith.constant 0 : index
    %39 = vector.load %arg2[%c7, %c0_24, %c0_25] : memref<9x4x4xf32, #tpu.memory_space<vmem>>, vector<1x4x4xf32>
    %40 = vector.shape_cast %39 : vector<1x4x4xf32> to vector<4x4xf32>
    %cst_26 = arith.constant dense<0.000000e+00> : vector<4x288xf32>
    %41 = tpu.matmul %40, %38, %cst_26 {dimension_numbers = #tpu.dot_dimension_numbers<[1], [0], [0], [1], [0, 0, 1, 1], [], []>} : vector<4x4xf32>, vector<4x288xf32>, vector<4x288xf32> -> vector<4x288xf32>
    %42 = arith.addf %37, %41 : vector<4x288xf32>
    %43 = vector.extract_strided_slice %1 {offsets = [0, 38], sizes = [4, 288], strides = [1, 1]} : vector<4x342xf32> to vector<4x288xf32>
    %c8 = arith.constant 8 : index
    %c0_27 = arith.constant 0 : index
    %c0_28 = arith.constant 0 : index
    %44 = vector.load %arg2[%c8, %c0_27, %c0_28] : memref<9x4x4xf32, #tpu.memory_space<vmem>>, vector<1x4x4xf32>
    %45 = vector.shape_cast %44 : vector<1x4x4xf32> to vector<4x4xf32>
    %cst_29 = arith.constant dense<0.000000e+00> : vector<4x288xf32>
    %46 = tpu.matmul %45, %43, %cst_29 {dimension_numbers = #tpu.dot_dimension_numbers<[1], [0], [0], [1], [0, 0, 1, 1], [], []>} : vector<4x4xf32>, vector<4x288xf32>, vector<4x288xf32> -> vector<4x288xf32>
    %47 = arith.addf %42, %46 : vector<4x288xf32>
    %c0_30 = arith.constant 0 : index
    %c0_31 = arith.constant 0 : index
    %48 = vector.load %arg3[%c0_30, %c0_31] : memref<4x1xf32, #tpu.memory_space<vmem>>, vector<4x1xf32>
    %49 = vector.broadcast %48 : vector<4x1xf32> to vector<4x288xf32>
    %50 = arith.addf %47, %49 : vector<4x288xf32>
    %51 = vector.extract_strided_slice %50 {offsets = [0, 0], sizes = [1, 288], strides = [1, 1]} : vector<4x288xf32> to vector<1x288xf32>
    %52 = arith.negf %51 : vector<1x288xf32>
    %53 = math.exp %52 : vector<1x288xf32>
    %cst_32 = arith.constant 1.000000e+00 : f32
    %54 = vector.broadcast %cst_32 : f32 to vector<1x288xf32>
    %55 = arith.addf %54, %53 : vector<1x288xf32>
    %56 = arith.divf %54, %55 : vector<1x288xf32>
    %c0_33 = arith.constant 0 : index
    %c0_34 = arith.constant 0 : index
    %c0_35 = arith.constant 0 : index
    %57 = vector.load %arg4[%c0_33, %c0_34, %c0_35] : memref<1x4x288xf32, #tpu.memory_space<vmem>>, vector<1x1x288xf32>
    %58 = vector.shape_cast %57 : vector<1x1x288xf32> to vector<1x288xf32>
    %59 = vector.shape_cast %56 : vector<1x288xf32> to vector<1x1x288xf32>
    tpu.vector_store %arg4[%c0_33, %c0_34, %c0_35], %59 {strides = array<i32>} : memref<1x4x288xf32, #tpu.memory_space<vmem>>, vector<1x1x288xf32>,
    %60 = vector.extract_strided_slice %50 {offsets = [1, 0], sizes = [1, 288], strides = [1, 1]} : vector<4x288xf32> to vector<1x288xf32>
    %61 = math.tanh %60 : vector<1x288xf32>
    %c0_36 = arith.constant 0 : index
    %c1_37 = arith.constant 1 : index
    %c0_38 = arith.constant 0 : index
    %62 = vector.load %arg4[%c0_36, %c1_37, %c0_38] : memref<1x4x288xf32, #tpu.memory_space<vmem>>, vector<1x1x288xf32>
    %63 = vector.shape_cast %62 : vector<1x1x288xf32> to vector<1x288xf32>
    %64 = vector.shape_cast %61 : vector<1x288xf32> to vector<1x1x288xf32>
    tpu.vector_store %arg4[%c0_36, %c1_37, %c0_38], %64 {strides = array<i32>} : memref<1x4x288xf32, #tpu.memory_space<vmem>>, vector<1x1x288xf32>,
    %65 = vector.extract_strided_slice %50 {offsets = [2, 0], sizes = [1, 288], strides = [1, 1]} : vector<4x288xf32> to vector<1x288xf32>
    %c0_39 = arith.constant 0 : index
    %c2_40 = arith.constant 2 : index
    %c0_41 = arith.constant 0 : index
    %66 = vector.load %arg4[%c0_39, %c2_40, %c0_41] : memref<1x4x288xf32, #tpu.memory_space<vmem>>, vector<1x1x288xf32>
    %67 = vector.shape_cast %66 : vector<1x1x288xf32> to vector<1x288xf32>
    %68 = vector.shape_cast %65 : vector<1x288xf32> to vector<1x1x288xf32>
    tpu.vector_store %arg4[%c0_39, %c2_40, %c0_41], %68 {strides = array<i32>} : memref<1x4x288xf32, #tpu.memory_space<vmem>>, vector<1x1x288xf32>,
    %69 = vector.extract_strided_slice %50 {offsets = [3, 0], sizes = [1, 288], strides = [1, 1]} : vector<4x288xf32> to vector<1x288xf32>
    %cst_42 = arith.constant 0.000000e+00 : f32
    %70 = vector.broadcast %cst_42 : f32 to vector<1x288xf32>
    %71 = arith.maximumf %69, %70 : vector<1x288xf32>
    %c0_43 = arith.constant 0 : index
    %c3_44 = arith.constant 3 : index
    %c0_45 = arith.constant 0 : index
    %72 = vector.load %arg4[%c0_43, %c3_44, %c0_45] : memref<1x4x288xf32, #tpu.memory_space<vmem>>, vector<1x1x288xf32>
    %73 = vector.shape_cast %72 : vector<1x1x288xf32> to vector<1x288xf32>
    %74 = vector.shape_cast %71 : vector<1x288xf32> to vector<1x1x288xf32>
    tpu.vector_store %arg4[%c0_43, %c3_44, %c0_45], %74 {strides = array<i32>} : memref<1x4x288xf32, #tpu.memory_space<vmem>>, vector<1x1x288xf32>,
    return
  }
  func.func @transform_0(%arg0: i32) -> (i32, i32, i32) {
    %c0_i32 = arith.constant 0 : i32
    %c0_i32_0 = arith.constant 0 : i32
    %c0_i32_1 = arith.constant 0 : i32
    return %arg0, %c0_i32, %c0_i32_0 : i32, i32, i32
  }
  func.func @transform_1(%arg0: i32) -> (i32, i32, i32) {
    %c0_i32 = arith.constant 0 : i32
    %c0_i32_0 = arith.constant 0 : i32
    %c0_i32_1 = arith.constant 0 : i32
    %c0_i32_2 = arith.constant 0 : i32
    return %c0_i32, %c0_i32_0, %c0_i32_1 : i32, i32, i32
  }
  func.func @transform_2(%arg0: i32) -> (i32, i32) {
    %c0_i32 = arith.constant 0 : i32
    %c0_i32_0 = arith.constant 0 : i32
    %c0_i32_1 = arith.constant 0 : i32
    return %c0_i32, %c0_i32_0 : i32, i32
  }
  func.func @transform_3(%arg0: i32) -> (i32, i32, i32) {
    %c0_i32 = arith.constant 0 : i32
    %c0_i32_0 = arith.constant 0 : i32
    %c0_i32_1 = arith.constant 0 : i32
    return %arg0, %c0_i32, %c0_i32_0 : i32, i32, i32
  }
}

</mosaic_0001>

<llo_original>
// kernel: generic_forward.1
$region0: #{generic_forward.1}
  #allocation0 [shape = 'u32[]', space=smem, size = 0x4, offset = 0x4, fixed_abs, tag = 'smem constant byte address 0x4 - core index']
  #allocation1 [shape = 'u32[72,128]{1,0:T(1,128)}', space=vmem, size = 0x9000, scoped, tag = 'internal scratch']
  %s0 = inlined_call_operand.vmem [shape: f32[2,4,342], index: 0, kind: input, shape index: {}]
  %s1 = inlined_call_operand.vmem [shape: f32[9,4,4], index: 1, kind: input, shape index: {}]
  %s2 = inlined_call_operand.vmem [shape: f32[4,1], index: 2, kind: input, shape index: {}]
  %s3 = inlined_call_operand.vmem [shape: f32[2,4,288], index: 3, kind: output, shape index: {}]
  %s4 = sld [smem:[#allocation0]]
  $region45: #{generic_forward.1} parent=0
    _
  %s6 = ssub.s32 1, %s4
  %s7 = scalar_select 0, %s6, %s4
  loop: start=0, step=1, limit=4
  $region2: #{generic_forward.1} parent=0 // loop_pre_header
    _
  $region3: #{generic_forward.1} parent=0 // loop_header
    %s9 = sphi 0, %s13
    %p10 = scmp.ge.s32.totalorder %s9, 4
    %s19 = sphi 0, %s21
    %s22 = sphi 0, %s19
    %s23 = sphi 0, %s22
    %s39 = sphi 0, %s23
    %s43 = sphi 0, %s43
    %s45 = sphi 0, %s43
    %s46 = sphi 0, %s45
    %s60 = sphi 0, %s46
    %s64 = sphi 0, %s64
    %s66 = sphi 0, %s64
    %s67 = sphi 0, %s66
    %s81 = sphi 0, %s67
    %s87 = sphi 0, %s89
    %s90 = sphi 0, %s87
    %s91 = sphi 0, %s90
    %s107 = sphi 0, %s91
  $region4: #{generic_forward.1} parent=0 // loop_header_branch
    %12 = sbr.rel (%p10) target = $region8
  $region5: #{generic_forward.1} parent=0 // loop_body
    %s14 = ssub.s32 %s9, 1
    %s15 = ssub.s32 %s9, 2
    %s16 = sadd.s32 %s9, 1
    %s17 = ssub.s32 %s9, %s16
    %p18 = scmp.eq.s32.totalorder %s17, 0
    %s20 = sadd.s32 %s19, 1
    %s21 = scalar_select %p18, %s19, %s20
    %p24 = pneg %p18
    %p25 = scmp.eq.s32.totalorder %s9, 1
    %p26 = por %p24, %p25
    %p27 = scmp.ne.s32.totalorder %s19, %s22
    %p28 = scmp.eq.s32.totalorder %s9, 0
    %p29 = por %p27, %p28
    %p30 = scmp.ne.s32.totalorder %s19, %s22
    %p31 = scmp.eq.s32.totalorder %s14, 1
    %p32 = por %p30, %p31
    %p33 = scmp.ne.s32.totalorder %s22, %s23
    %p34 = scmp.eq.s32.totalorder %s14, 0
    %p35 = por %p33, %p34
    %p36 = scmp.ne.s32.totalorder %s22, %s23
    %p37 = scmp.eq.s32.totalorder %s15, 1
    %p38 = por %p36, %p37
    %p40 = scmp.ne.s32.totalorder %s23, %s39
    %p41 = scmp.eq.s32.totalorder %s15, 0
    %p42 = por %p40, %p41
    %s44 = sadd.s32 %s43, 1
    %p47 = scmp.eq.s32.totalorder %s9, 1
    %p48 = scmp.ne.s32.totalorder %s43, %s45
    %p49 = scmp.eq.s32.totalorder %s9, 0
    %p50 = por %p48, %p49
    %p51 = scmp.ne.s32.totalorder %s43, %s45
    %p52 = scmp.eq.s32.totalorder %s14, 1
    %p53 = por %p51, %p52
    %p54 = scmp.ne.s32.totalorder %s45, %s46
    %p55 = scmp.eq.s32.totalorder %s14, 0
    %p56 = por %p54, %p55
    %p57 = scmp.ne.s32.totalorder %s45, %s46
    %p58 = scmp.eq.s32.totalorder %s15, 1
    %p59 = por %p57, %p58
    %p61 = scmp.ne.s32.totalorder %s46, %s60
    %p62 = scmp.eq.s32.totalorder %s15, 0
    %p63 = por %p61, %p62
    %s65 = sadd.s32 %s64, 1
    %p68 = scmp.eq.s32.totalorder %s9, 1
    %p69 = scmp.ne.s32.totalorder %s64, %s66
    %p70 = scmp.eq.s32.totalorder %s9, 0
    %p71 = por %p69, %p70
    %p72 = scmp.ne.s32.totalorder %s64, %s66
    %p73 = scmp.eq.s32.totalorder %s14, 1
    %p74 = por %p72, %p73
    %p75 = scmp.ne.s32.totalorder %s66, %s67
    %p76 = scmp.eq.s32.totalorder %s14, 0
    %p77 = por %p75, %p76
    %p78 = scmp.ne.s32.totalorder %s66, %s67
    %p79 = scmp.eq.s32.totalorder %s15, 1
    %p80 = por %p78, %p79
    %p82 = scmp.ne.s32.totalorder %s67, %s81
    %p83 = scmp.eq.s32.totalorder %s15, 0
    %p84 = por %p82, %p83
    %s85 = ssub.s32 %s9, %s16
    %p86 = scmp.eq.s32.totalorder %s85, 0
    %s88 = sadd.s32 %s87, 1
    %s89 = scalar_select %p86, %s87, %s88
    %p92 = pneg %p86
    %p93 = scmp.eq.s32.totalorder %s9, 1
    %p94 = por %p92, %p93
    %p95 = scmp.ne.s32.totalorder %s87, %s90
    %p96 = scmp.eq.s32.totalorder %s9, 0
    %p97 = por %p95, %p96
    %p98 = scmp.ne.s32.totalorder %s87, %s90
    %p99 = scmp.eq.s32.totalorder %s14, 1
    %p100 = por %p98, %p99
    %p101 = scmp.ne.s32.totalorder %s90, %s91
    %p102 = scmp.eq.s32.totalorder %s14, 0
    %p103 = por %p101, %p102
    %p104 = scmp.ne.s32.totalorder %s90, %s91
    %p105 = scmp.eq.s32.totalorder %s15, 1
    %p106 = por %p104, %p105
    %p108 = scmp.ne.s32.totalorder %s91, %s107
    %p109 = scmp.eq.s32.totalorder %s15, 0
    %p110 = por %p108, %p109
    %p111 = scmp.le.s32.totalorder 1, %s9
    %p112 = scmp.lt.s32.totalorder %s9, 3
    %p113 = pnand %p111, %p112
    %p114 = pneg %p113
    // Predicated region
    $region9: #{generic_forward.1} parent=5 // pred_check
      _
    $region10: #{generic_forward.1} parent=5 // pred_check_branch
      %116 = sbr.rel (%p113) target = $region12
    $region11: #{generic_forward.1} parent=5 // pred_region
      %s117 = ssub.s32 %s9, 1
      // Predicated region
      $region13: #{generic_forward.1} parent=11 // pred_check
        %p118 = pneg %p56
      $region14: #{generic_forward.1} parent=11 // pred_check_branch
        %120 = sbr.rel (%p118) target = $region16
      $region15: #{generic_forward.1} parent=11 // pred_region
        _
      $region16: #{generic_forward.1} parent=11 // pred_fallthru
        _
      // Predicated region
      $region17: #{generic_forward.1} parent=11 // pred_check
        %p121 = pneg %p77
      $region18: #{generic_forward.1} parent=11 // pred_check_branch
        %123 = sbr.rel (%p121) target = $region20
      $region19: #{generic_forward.1} parent=11 // pred_region
        _
      $region20: #{generic_forward.1} parent=11 // pred_fallthru
        _
    $region12: #{generic_forward.1} parent=5 // pred_fallthru
      _
    %p124 = scmp.lt.s32.totalorder %s9, 2
    // Predicated region
    $region21: #{generic_forward.1} parent=5 // pred_check
      %p125 = pneg %p124
    $region22: #{generic_forward.1} parent=5 // pred_check_branch
      %127 = sbr.rel (%p125) target = $region24
    $region23: #{generic_forward.1} parent=5 // pred_region
      // Predicated region
      $region25: #{generic_forward.1} parent=23 // pred_check
        %p128 = pneg %p29
      $region26: #{generic_forward.1} parent=23 // pred_check_branch
        %130 = sbr.rel (%p128) target = $region28
      $region27: #{generic_forward.1} parent=23 // pred_region
        %p131 = scmp.lt.s32.totalorder %s9, 1
        %s132 = scalar_select %p131, %s9, 1
        %s133 = smul.addr %s132, 3
        %s134 = smul.addr %s133, 4
        %s135 = scalar_lea.vmem %s0, %s134
      $region28: #{generic_forward.1} parent=23 // pred_fallthru
        _
    $region24: #{generic_forward.1} parent=5 // pred_fallthru
      _
    %p136 = scmp.le.s32.totalorder 1, %s9
    %p137 = scmp.lt.s32.totalorder %s9, 3
    %p138 = pnand %p136, %p137
    %p139 = pneg %p138
    // Predicated region
    $region29: #{generic_forward.1} parent=5 // pred_check
      _
    $region30: #{generic_forward.1} parent=5 // pred_check_branch
      %141 = sbr.rel (%p138) target = $region32
    $region31: #{generic_forward.1} parent=5 // pred_region
      %s142 = ssub.s32 %s9, 1
      %p143 = scmp.lt.s32.totalorder %s14, 1
      %s144 = scalar_select %p143, %s14, 1
      %s145 = smul.addr %s144, 3
      %s146 = smul.addr %s145, 4
      %s147 = scalar_lea.vmem %s0, %s146
      %p148 = pneg %p35
      %p149 = pneg %p32
      %p150 = pneg %p56
      %p151 = pneg %p53
      %p152 = pneg %p77
      %p153 = pneg %p74
      %p154 = pneg %p103
      %p155 = pneg %p100
      %p156 = scmp.lt.s32.totalorder %s14, 1
      %s157 = scalar_select %p156, %s14, 1
      %s158 = smul.addr %s157, 3
      %s159 = smul.addr %s158, 4
      %s160 = scalar_lea.vmem %s3, %s159
      %p161 = scmp.lt.s32.totalorder %s14, 1
      %s162 = scalar_select %p161, %s14, 1
      %s163 = smul.addr %s162, 3
      %s164 = smul.addr %s163, 4
      %s165 = scalar_lea.vmem %s0, %s164
      %p166 = scmp.lt.s32.totalorder %s14, 1
      %s167 = scalar_select %p166, %s14, 1
      %s168 = smul.addr %s167, 3
      %s169 = smul.addr %s168, 4
      %s170 = scalar_lea.vmem %s3, %s169
      %v171 = vld [vmem:[%s165] sm:$0xff]
      %v172 = vld [vmem:[%s165 + $0x8] sm:$0xf]
      %v173 = vld [vmem:[%s1] sm:$0xf]
      %s174 = scalar_lea.vmem %s1, 4
      %v175 = vld [vmem:[%s174] sm:$0xf]
      %178 = vst [vmem:[#allocation1] ss:$2 sm:$0xff] %v171
      %s179 = scalar_lea.vmem [#allocation1], 16
      %180 = vst [vmem:[%s179] ss:$2 sm:$0xff] %v172
      %v181 = vld.sshfl [vmem:[#allocation1] sm:$0xff pattern:$0x75316420]
      %v182 = vld.sshfl [vmem:[#allocation1 + $0x8] sm:$0xff pattern:$0x75316420]
      %v183 = vld.sshfl [vmem:[#allocation1 + $0x10] sm:$0xff pattern:$0x75316420]
      %184 = vrot.lane.b32.xlu0 %v181, 127
      %v185 = vpop.permute.xlu0 %184
      %186 = vrot.lane.b32.xlu0 %v182, 127
      %v187 = vpop.permute.xlu0 %186
      %188 = vrot.lane.b32.xlu0 %v183, 127
      %v189 = vpop.permute.xlu0 %188
      %vm190 = vcmask 1039360
      %v191 = vsel %vm190, %v185, %v187
      %v192 = vsel %vm190, %v187, %v189
      %vm193 = vcmask 31744
      %v195 = vsel %vm193, %v175, 0
      %vm197 = vcmask 1043456
      %v198 = vsel %vm197, %v191, 0
      %v200 = vsel %vm197, %v192, 0
      %v202 = vsel %vm197, %v189, 0
      %204 = vmatpush.msra.mxu0 0.0
      %205 = vmatpush.msra.mxu0 0.0
      %206 = vmatpush.msra.mxu0 0.0
      %207 = vmatpush.msra.mxu0 0.0
      %208 = vmatpush.msra.mxu0 0.0
      %209 = vmatpush.msra.mxu0 0.0
      %210 = vmatpush.msra.mxu0 0.0
      %211 = vmatpush.msra.mxu0 0.0
      %212 = vmatpush.msra.mxu0 0.0
      %213 = vmatpush.msra.mxu0 0.0
      %214 = vmatpush.msra.mxu0 0.0
      %215 = vmatpush.msra.mxu0 0.0
      %216 = vmatpush.msra.mxu0 0.0
      %217 = vmatpush.msra.mxu0 0.0
      %218 = vmatpush.msra.mxu0 0.0
      %219 = vmatpush.msra.mxu0 %v198
      %220 = vmatmul.f32.gmra.mxu0 %v195
      %v221 = vpop.f32.mrf.mxu0
      %v222 = vadd.f32 0.0, %v221
      %223 = vdwg.mxu0
      %224 = vmatpush.msra.mxu0 0.0
      %225 = vmatpush.msra.mxu0 0.0
      %226 = vmatpush.msra.mxu0 0.0
      %227 = vmatpush.msra.mxu0 0.0
      %228 = vmatpush.msra.mxu0 0.0
      %229 = vmatpush.msra.mxu0 0.0
      %230 = vmatpush.msra.mxu0 0.0
      %231 = vmatpush.msra.mxu0 0.0
      %232 = vmatpush.msra.mxu0 0.0
      %233 = vmatpush.msra.mxu0 0.0
      %234 = vmatpush.msra.mxu0 0.0
      %235 = vmatpush.msra.mxu0 0.0
      %236 = vmatpush.msra.mxu0 0.0
      %237 = vmatpush.msra.mxu0 0.0
      %238 = vmatpush.msra.mxu0 0.0
      %239 = vmatpush.msra.mxu0 %v200
      %240 = vmatmul.f32.gmra.mxu0 %v195
      %v241 = vpop.f32.mrf.mxu0
      %v242 = vadd.f32 0.0, %v241
      %243 = vdwg.mxu0
      %244 = vmatpush.msra.mxu0 0.0
      %245 = vmatpush.msra.mxu0 0.0
      %246 = vmatpush.msra.mxu0 0.0
      %247 = vmatpush.msra.mxu0 0.0
      %248 = vmatpush.msra.mxu0 0.0
      %249 = vmatpush.msra.mxu0 0.0
      %250 = vmatpush.msra.mxu0 0.0
      %251 = vmatpush.msra.mxu0 0.0
      %252 = vmatpush.msra.mxu0 0.0
      %253 = vmatpush.msra.mxu0 0.0
      %254 = vmatpush.msra.mxu0 0.0
      %255 = vmatpush.msra.mxu0 0.0
      %256 = vmatpush.msra.mxu0 0.0
      %257 = vmatpush.msra.mxu0 0.0
      %258 = vmatpush.msra.mxu0 0.0
      %259 = vmatpush.msra.mxu0 %v202
      %260 = vmatmul.f32.gmra.mxu0 %v195
      %v261 = vpop.f32.mrf.mxu0
      %v262 = vadd.f32 0.0, %v261
      %263 = vdwg.mxu0
      %264 = vst [vmem:[#allocation1] ss:$2 sm:$0xff] %v171
      %s265 = scalar_lea.vmem [#allocation1], 16
      %266 = vst [vmem:[%s265] ss:$2 sm:$0xff] %v172
      %v267 = vld.sshfl [vmem:[#allocation1] sm:$0xff pattern:$0x75316420]
      %v268 = vld.sshfl [vmem:[#allocation1 + $0x8] sm:$0xff pattern:$0x75316420]
      %v269 = vld.sshfl [vmem:[#allocation1 + $0x10] sm:$0xff pattern:$0x75316420]
      %v271 = vsel %vm193, %v173, 0
      %v273 = vsel %vm197, %v267, 0
      %v275 = vsel %vm197, %v268, 0
      %v277 = vsel %vm197, %v269, 0
      %279 = vmatpush.msra.mxu0 0.0
      %280 = vmatpush.msra.mxu0 0.0
      %281 = vmatpush.msra.mxu0 0.0
      %282 = vmatpush.msra.mxu0 0.0
      %283 = vmatpush.msra.mxu0 0.0
      %284 = vmatpush.msra.mxu0 0.0
      %285 = vmatpush.msra.mxu0 0.0
      %286 = vmatpush.msra.mxu0 0.0
      %287 = vmatpush.msra.mxu0 0.0
      %288 = vmatpush.msra.mxu0 0.0
      %289 = vmatpush.msra.mxu0 0.0
      %290 = vmatpush.msra.mxu0 0.0
      %291 = vmatpush.msra.mxu0 0.0
      %292 = vmatpush.msra.mxu0 0.0
      %293 = vmatpush.msra.mxu0 0.0
      %294 = vmatpush.msra.mxu0 %v273
      %295 = vmatmul.f32.gmra.mxu0 %v271
      %v296 = vpop.f32.mrf.mxu0
      %v297 = vadd.f32 %v222, %v296
      %298 = vdwg.mxu0
      %299 = vmatpush.msra.mxu0 0.0
      %300 = vmatpush.msra.mxu0 0.0
      %301 = vmatpush.msra.mxu0 0.0
      %302 = vmatpush.msra.mxu0 0.0
      %303 = vmatpush.msra.mxu0 0.0
      %304 = vmatpush.msra.mxu0 0.0
      %305 = vmatpush.msra.mxu0 0.0
      %306 = vmatpush.msra.mxu0 0.0
      %307 = vmatpush.msra.mxu0 0.0
      %308 = vmatpush.msra.mxu0 0.0
      %309 = vmatpush.msra.mxu0 0.0
      %310 = vmatpush.msra.mxu0 0.0
      %311 = vmatpush.msra.mxu0 0.0
      %312 = vmatpush.msra.mxu0 0.0
      %313 = vmatpush.msra.mxu0 0.0
      %314 = vmatpush.msra.mxu0 %v275
      %315 = vmatmul.f32.gmra.mxu0 %v271
      %v316 = vpop.f32.mrf.mxu0
      %v317 = vadd.f32 %v242, %v316
      %318 = vdwg.mxu0
      %319 = vmatpush.msra.mxu0 0.0
      %320 = vmatpush.msra.mxu0 0.0
      %321 = vmatpush.msra.mxu0 0.0
      %322 = vmatpush.msra.mxu0 0.0
      %323 = vmatpush.msra.mxu0 0.0
      %324 = vmatpush.msra.mxu0 0.0
      %325 = vmatpush.msra.mxu0 0.0
      %326 = vmatpush.msra.mxu0 0.0
      %327 = vmatpush.msra.mxu0 0.0
      %328 = vmatpush.msra.mxu0 0.0
      %329 = vmatpush.msra.mxu0 0.0
      %330 = vmatpush.msra.mxu0 0.0
      %331 = vmatpush.msra.mxu0 0.0
      %332 = vmatpush.msra.mxu0 0.0
      %333 = vmatpush.msra.mxu0 0.0
      %334 = vmatpush.msra.mxu0 %v277
      %335 = vmatmul.f32.gmra.mxu0 %v271
      %v336 = vpop.f32.mrf.mxu0
      %v337 = vadd.f32 %v262, %v336
      %338 = vdwg.mxu0
      %s339 = scalar_lea.vmem %s1, 8
      %v340 = vld [vmem:[%s339] sm:$0xf]
      %341 = vst [vmem:[#allocation1] ss:$2 sm:$0xff] %v171
      %s342 = scalar_lea.vmem [#allocation1], 16
      %343 = vst [vmem:[%s342] ss:$2 sm:$0xff] %v172
      %v344 = vld.sshfl [vmem:[#allocation1] sm:$0xff pattern:$0x75316420]
      %v345 = vld.sshfl [vmem:[#allocation1 + $0x8] sm:$0xff pattern:$0x75316420]
      %v346 = vld.sshfl [vmem:[#allocation1 + $0x10] sm:$0xff pattern:$0x75316420]
      %347 = vrot.lane.b32.xlu0 %v344, 126
      %v348 = vpop.permute.xlu0 %347
      %349 = vrot.lane.b32.xlu0 %v345, 126
      %v350 = vpop.permute.xlu0 %349
      %351 = vrot.lane.b32.xlu0 %v346, 126
      %v352 = vpop.permute.xlu0 %351
      %vm353 = vcmask 1031168
      %v354 = vsel %vm353, %v348, %v350
      %v355 = vsel %vm353, %v350, %v352
      %v357 = vsel %vm193, %v340, 0
      %v359 = vsel %vm197, %v354, 0
      %v361 = vsel %vm197, %v355, 0
      %v363 = vsel %vm197, %v352, 0
      %365 = vmatpush.msra.mxu0 0.0
      %366 = vmatpush.msra.mxu0 0.0
      %367 = vmatpush.msra.mxu0 0.0
      %368 = vmatpush.msra.mxu0 0.0
      %369 = vmatpush.msra.mxu0 0.0
      %370 = vmatpush.msra.mxu0 0.0
      %371 = vmatpush.msra.mxu0 0.0
      %372 = vmatpush.msra.mxu0 0.0
      %373 = vmatpush.msra.mxu0 0.0
      %374 = vmatpush.msra.mxu0 0.0
      %375 = vmatpush.msra.mxu0 0.0
      %376 = vmatpush.msra.mxu0 0.0
      %377 = vmatpush.msra.mxu0 0.0
      %378 = vmatpush.msra.mxu0 0.0
      %379 = vmatpush.msra.mxu0 0.0
      %380 = vmatpush.msra.mxu0 %v359
      %381 = vmatmul.f32.gmra.mxu0 %v357
      %v382 = vpop.f32.mrf.mxu0
      %v383 = vadd.f32 0.0, %v382
      %384 = vdwg.mxu0
      %385 = vmatpush.msra.mxu0 0.0
      %386 = vmatpush.msra.mxu0 0.0
      %387 = vmatpush.msra.mxu0 0.0
      %388 = vmatpush.msra.mxu0 0.0
      %389 = vmatpush.msra.mxu0 0.0
      %390 = vmatpush.msra.mxu0 0.0
      %391 = vmatpush.msra.mxu0 0.0
      %392 = vmatpush.msra.mxu0 0.0
      %393 = vmatpush.msra.mxu0 0.0
      %394 = vmatpush.msra.mxu0 0.0
      %395 = vmatpush.msra.mxu0 0.0
      %396 = vmatpush.msra.mxu0 0.0
      %397 = vmatpush.msra.mxu0 0.0
      %398 = vmatpush.msra.mxu0 0.0
      %399 = vmatpush.msra.mxu0 0.0
      %400 = vmatpush.msra.mxu0 %v361
      %401 = vmatmul.f32.gmra.mxu0 %v357
      %v402 = vpop.f32.mrf.mxu0
      %v403 = vadd.f32 0.0, %v402
      %404 = vdwg.mxu0
      %405 = vmatpush.msra.mxu0 0.0
      %406 = vmatpush.msra.mxu0 0.0
      %407 = vmatpush.msra.mxu0 0.0
      %408 = vmatpush.msra.mxu0 0.0
      %409 = vmatpush.msra.mxu0 0.0
      %410 = vmatpush.msra.mxu0 0.0
      %411 = vmatpush.msra.mxu0 0.0
      %412 = vmatpush.msra.mxu0 0.0
      %413 = vmatpush.msra.mxu0 0.0
      %414 = vmatpush.msra.mxu0 0.0
      %415 = vmatpush.msra.mxu0 0.0
      %416 = vmatpush.msra.mxu0 0.0
      %417 = vmatpush.msra.mxu0 0.0
      %418 = vmatpush.msra.mxu0 0.0
      %419 = vmatpush.msra.mxu0 0.0
      %420 = vmatpush.msra.mxu0 %v363
      %421 = vmatmul.f32.gmra.mxu0 %v357
      %v422 = vpop.f32.mrf.mxu0
      %v423 = vadd.f32 0.0, %v422
      %424 = vdwg.mxu0
      %v425 = vadd.f32 %v297, %v383
      %v426 = vadd.f32 %v317, %v403
      %v427 = vadd.f32 %v337, %v423
      %s428 = scalar_lea.vmem %s1, 12
      %v429 = vld [vmem:[%s428] sm:$0xf]
      %430 = vst [vmem:[#allocation1] ss:$2 sm:$0xff] %v171
      %s431 = scalar_lea.vmem [#allocation1], 16
      %432 = vst [vmem:[%s431] ss:$2 sm:$0xff] %v172
      %v433 = vld.sshfl [vmem:[#allocation1] sm:$0xff pattern:$0x75316420]
      %v434 = vld.sshfl [vmem:[#allocation1 + $0x8] sm:$0xff pattern:$0x75316420]
      %v435 = vld.sshfl [vmem:[#allocation1 + $0x10] sm:$0xff pattern:$0x75316420]
      %436 = vrot.lane.b32.xlu0 %v433, 110
      %v437 = vpop.permute.xlu0 %436
      %438 = vrot.lane.b32.xlu0 %v434, 110
      %v439 = vpop.permute.xlu0 %438
      %440 = vrot.lane.b32.xlu0 %v435, 110
      %v441 = vpop.permute.xlu0 %440
      %vm442 = vcmask 900096
      %v443 = vsel %vm442, %v437, %v439
      %v444 = vsel %vm442, %v439, %v441
      %v446 = vsel %vm193, %v429, 0
      %v448 = vsel %vm197, %v443, 0
      %v450 = vsel %vm197, %v444, 0
      %v452 = vsel %vm197, %v441, 0
      %454 = vmatpush.msra.mxu0 0.0
      %455 = vmatpush.msra.mxu0 0.0
      %456 = vmatpush.msra.mxu0 0.0
      %457 = vmatpush.msra.mxu0 0.0
      %458 = vmatpush.msra.mxu0 0.0
      %459 = vmatpush.msra.mxu0 0.0
      %460 = vmatpush.msra.mxu0 0.0
      %461 = vmatpush.msra.mxu0 0.0
      %462 = vmatpush.msra.mxu0 0.0
      %463 = vmatpush.msra.mxu0 0.0
      %464 = vmatpush.msra.mxu0 0.0
      %465 = vmatpush.msra.mxu0 0.0
      %466 = vmatpush.msra.mxu0 0.0
      %467 = vmatpush.msra.mxu0 0.0
      %468 = vmatpush.msra.mxu0 0.0
      %469 = vmatpush.msra.mxu0 %v448
      %470 = vmatmul.f32.gmra.mxu0 %v446
      %v471 = vpop.f32.mrf.mxu0
      %v472 = vadd.f32 0.0, %v471
      %473 = vdwg.mxu0
      %474 = vmatpush.msra.mxu0 0.0
      %475 = vmatpush.msra.mxu0 0.0
      %476 = vmatpush.msra.mxu0 0.0
      %477 = vmatpush.msra.mxu0 0.0
      %478 = vmatpush.msra.mxu0 0.0
      %479 = vmatpush.msra.mxu0 0.0
      %480 = vmatpush.msra.mxu0 0.0
      %481 = vmatpush.msra.mxu0 0.0
      %482 = vmatpush.msra.mxu0 0.0
      %483 = vmatpush.msra.mxu0 0.0
      %484 = vmatpush.msra.mxu0 0.0
      %485 = vmatpush.msra.mxu0 0.0
      %486 = vmatpush.msra.mxu0 0.0
      %487 = vmatpush.msra.mxu0 0.0
      %488 = vmatpush.msra.mxu0 0.0
      %489 = vmatpush.msra.mxu0 %v450
      %490 = vmatmul.f32.gmra.mxu0 %v446
      %v491 = vpop.f32.mrf.mxu0
      %v492 = vadd.f32 0.0, %v491
      %493 = vdwg.mxu0
      %494 = vmatpush.msra.mxu0 0.0
      %495 = vmatpush.msra.mxu0 0.0
      %496 = vmatpush.msra.mxu0 0.0
      %497 = vmatpush.msra.mxu0 0.0
      %498 = vmatpush.msra.mxu0 0.0
      %499 = vmatpush.msra.mxu0 0.0
      %500 = vmatpush.msra.mxu0 0.0
      %501 = vmatpush.msra.mxu0 0.0
      %502 = vmatpush.msra.mxu0 0.0
      %503 = vmatpush.msra.mxu0 0.0
      %504 = vmatpush.msra.mxu0 0.0
      %505 = vmatpush.msra.mxu0 0.0
      %506 = vmatpush.msra.mxu0 0.0
      %507 = vmatpush.msra.mxu0 0.0
      %508 = vmatpush.msra.mxu0 0.0
      %509 = vmatpush.msra.mxu0 %v452
      %510 = vmatmul.f32.gmra.mxu0 %v446
      %v511 = vpop.f32.mrf.mxu0
      %v512 = vadd.f32 0.0, %v511
      %513 = vdwg.mxu0
      %v514 = vadd.f32 %v425, %v472
      %v515 = vadd.f32 %v426, %v492
      %v516 = vadd.f32 %v427, %v512
      %s517 = scalar_lea.vmem %s1, 16
      %v518 = vld [vmem:[%s517] sm:$0xf]
      %519 = vst [vmem:[#allocation1] ss:$2 sm:$0xff] %v171
      %s520 = scalar_lea.vmem [#allocation1], 16
      %521 = vst [vmem:[%s520] ss:$2 sm:$0xff] %v172
      %v522 = vld.sshfl [vmem:[#allocation1] sm:$0xff pattern:$0x75316420]
      %v523 = vld.sshfl [vmem:[#allocation1 + $0x8] sm:$0xff pattern:$0x75316420]
      %v524 = vld.sshfl [vmem:[#allocation1 + $0x10] sm:$0xff pattern:$0x75316420]
      %525 = vrot.lane.b32.xlu0 %v522, 109
      %v526 = vpop.permute.xlu0 %525
      %527 = vrot.lane.b32.xlu0 %v523, 109
      %v528 = vpop.permute.xlu0 %527
      %529 = vrot.lane.b32.xlu0 %v524, 109
      %v530 = vpop.permute.xlu0 %529
      %vm531 = vcmask 891904
      %v532 = vsel %vm531, %v526, %v528
      %v533 = vsel %vm531, %v528, %v530
      %v535 = vsel %vm193, %v518, 0
      %v537 = vsel %vm197, %v532, 0
      %v539 = vsel %vm197, %v533, 0
      %v541 = vsel %vm197, %v530, 0
      %543 = vmatpush.msra.mxu0 0.0
      %544 = vmatpush.msra.mxu0 0.0
      %545 = vmatpush.msra.mxu0 0.0
      %546 = vmatpush.msra.mxu0 0.0
      %547 = vmatpush.msra.mxu0 0.0
      %548 = vmatpush.msra.mxu0 0.0
      %549 = vmatpush.msra.mxu0 0.0
      %550 = vmatpush.msra.mxu0 0.0
      %551 = vmatpush.msra.mxu0 0.0
      %552 = vmatpush.msra.mxu0 0.0
      %553 = vmatpush.msra.mxu0 0.0
      %554 = vmatpush.msra.mxu0 0.0
      %555 = vmatpush.msra.mxu0 0.0
      %556 = vmatpush.msra.mxu0 0.0
      %557 = vmatpush.msra.mxu0 0.0
      %558 = vmatpush.msra.mxu0 %v537
      %559 = vmatmul.f32.gmra.mxu0 %v535
      %v560 = vpop.f32.mrf.mxu0
      %v561 = vadd.f32 0.0, %v560
      %562 = vdwg.mxu0
      %563 = vmatpush.msra.mxu0 0.0
      %564 = vmatpush.msra.mxu0 0.0
      %565 = vmatpush.msra.mxu0 0.0
      %566 = vmatpush.msra.mxu0 0.0
      %567 = vmatpush.msra.mxu0 0.0
      %568 = vmatpush.msra.mxu0 0.0
      %569 = vmatpush.msra.mxu0 0.0
      %570 = vmatpush.msra.mxu0 0.0
      %571 = vmatpush.msra.mxu0 0.0
      %572 = vmatpush.msra.mxu0 0.0
      %573 = vmatpush.msra.mxu0 0.0
      %574 = vmatpush.msra.mxu0 0.0
      %575 = vmatpush.msra.mxu0 0.0
      %576 = vmatpush.msra.mxu0 0.0
      %577 = vmatpush.msra.mxu0 0.0
      %578 = vmatpush.msra.mxu0 %v539
      %579 = vmatmul.f32.gmra.mxu0 %v535
      %v580 = vpop.f32.mrf.mxu0
      %v581 = vadd.f32 0.0, %v580
      %582 = vdwg.mxu0
      %583 = vmatpush.msra.mxu0 0.0
      %584 = vmatpush.msra.mxu0 0.0
      %585 = vmatpush.msra.mxu0 0.0
      %586 = vmatpush.msra.mxu0 0.0
      %587 = vmatpush.msra.mxu0 0.0
      %588 = vmatpush.msra.mxu0 0.0
      %589 = vmatpush.msra.mxu0 0.0
      %590 = vmatpush.msra.mxu0 0.0
      %591 = vmatpush.msra.mxu0 0.0
      %592 = vmatpush.msra.mxu0 0.0
      %593 = vmatpush.msra.mxu0 0.0
      %594 = vmatpush.msra.mxu0 0.0
      %595 = vmatpush.msra.mxu0 0.0
      %596 = vmatpush.msra.mxu0 0.0
      %597 = vmatpush.msra.mxu0 0.0
      %598 = vmatpush.msra.mxu0 %v541
      %599 = vmatmul.f32.gmra.mxu0 %v535
      %v600 = vpop.f32.mrf.mxu0
      %v601 = vadd.f32 0.0, %v600
      %602 = vdwg.mxu0
      %v603 = vadd.f32 %v514, %v561
      %v604 = vadd.f32 %v515, %v581
      %v605 = vadd.f32 %v516, %v601
      %s606 = scalar_lea.vmem %s1, 20
      %v607 = vld [vmem:[%s606] sm:$0xf]
      %608 = vst [vmem:[#allocation1] ss:$2 sm:$0xff] %v171
      %s609 = scalar_lea.vmem [#allocation1], 16
      %610 = vst [vmem:[%s609] ss:$2 sm:$0xff] %v172
      %v611 = vld.sshfl [vmem:[#allocation1] sm:$0xff pattern:$0x75316420]
      %v612 = vld.sshfl [vmem:[#allocation1 + $0x8] sm:$0xff pattern:$0x75316420]
      %v613 = vld.sshfl [vmem:[#allocation1 + $0x10] sm:$0xff pattern:$0x75316420]
      %614 = vrot.lane.b32.xlu0 %v611, 108
      %v615 = vpop.permute.xlu0 %614
      %616 = vrot.lane.b32.xlu0 %v612, 108
      %v617 = vpop.permute.xlu0 %616
      %618 = vrot.lane.b32.xlu0 %v613, 108
      %v619 = vpop.permute.xlu0 %618
      %vm620 = vcmask 883712
      %v621 = vsel %vm620, %v615, %v617
      %v622 = vsel %vm620, %v617, %v619
      %v624 = vsel %vm193, %v607, 0
      %v626 = vsel %vm197, %v621, 0
      %v628 = vsel %vm197, %v622, 0
      %v630 = vsel %vm197, %v619, 0
      %632 = vmatpush.msra.mxu0 0.0
      %633 = vmatpush.msra.mxu0 0.0
      %634 = vmatpush.msra.mxu0 0.0
      %635 = vmatpush.msra.mxu0 0.0
      %636 = vmatpush.msra.mxu0 0.0
      %637 = vmatpush.msra.mxu0 0.0
      %638 = vmatpush.msra.mxu0 0.0
      %639 = vmatpush.msra.mxu0 0.0
      %640 = vmatpush.msra.mxu0 0.0
      %641 = vmatpush.msra.mxu0 0.0
      %642 = vmatpush.msra.mxu0 0.0
      %643 = vmatpush.msra.mxu0 0.0
      %644 = vmatpush.msra.mxu0 0.0
      %645 = vmatpush.msra.mxu0 0.0
      %646 = vmatpush.msra.mxu0 0.0
      %647 = vmatpush.msra.mxu0 %v626
      %648 = vmatmul.f32.gmra.mxu0 %v624
      %v649 = vpop.f32.mrf.mxu0
      %v650 = vadd.f32 0.0, %v649
      %651 = vdwg.mxu0
      %652 = vmatpush.msra.mxu0 0.0
      %653 = vmatpush.msra.mxu0 0.0
      %654 = vmatpush.msra.mxu0 0.0
      %655 = vmatpush.msra.mxu0 0.0
      %656 = vmatpush.msra.mxu0 0.0
      %657 = vmatpush.msra.mxu0 0.0
      %658 = vmatpush.msra.mxu0 0.0
      %659 = vmatpush.msra.mxu0 0.0
      %660 = vmatpush.msra.mxu0 0.0
      %661 = vmatpush.msra.mxu0 0.0
      %662 = vmatpush.msra.mxu0 0.0
      %663 = vmatpush.msra.mxu0 0.0
      %664 = vmatpush.msra.mxu0 0.0
      %665 = vmatpush.msra.mxu0 0.0
      %666 = vmatpush.msra.mxu0 0.0
      %667 = vmatpush.msra.mxu0 %v628
      %668 = vmatmul.f32.gmra.mxu0 %v624
      %v669 = vpop.f32.mrf.mxu0
      %v670 = vadd.f32 0.0, %v669
      %671 = vdwg.mxu0
      %672 = vmatpush.msra.mxu0 0.0
      %673 = vmatpush.msra.mxu0 0.0
      %674 = vmatpush.msra.mxu0 0.0
      %675 = vmatpush.msra.mxu0 0.0
      %676 = vmatpush.msra.mxu0 0.0
      %677 = vmatpush.msra.mxu0 0.0
      %678 = vmatpush.msra.mxu0 0.0
      %679 = vmatpush.msra.mxu0 0.0
      %680 = vmatpush.msra.mxu0 0.0
      %681 = vmatpush.msra.mxu0 0.0
      %682 = vmatpush.msra.mxu0 0.0
      %683 = vmatpush.msra.mxu0 0.0
      %684 = vmatpush.msra.mxu0 0.0
      %685 = vmatpush.msra.mxu0 0.0
      %686 = vmatpush.msra.mxu0 0.0
      %687 = vmatpush.msra.mxu0 %v630
      %688 = vmatmul.f32.gmra.mxu0 %v624
      %v689 = vpop.f32.mrf.mxu0
      %v690 = vadd.f32 0.0, %v689
      %691 = vdwg.mxu0
      %v692 = vadd.f32 %v603, %v650
      %v693 = vadd.f32 %v604, %v670
      %v694 = vadd.f32 %v605, %v690
      %s695 = scalar_lea.vmem %s1, 24
      %v696 = vld [vmem:[%s695] sm:$0xf]
      %697 = vst [vmem:[#allocation1] ss:$2 sm:$0xff] %v171
      %s698 = scalar_lea.vmem [#allocation1], 16
      %699 = vst [vmem:[%s698] ss:$2 sm:$0xff] %v172
      %v700 = vld.sshfl [vmem:[#allocation1] sm:$0xff pattern:$0x75316420]
      %v701 = vld.sshfl [vmem:[#allocation1 + $0x8] sm:$0xff pattern:$0x75316420]
      %v702 = vld.sshfl [vmem:[#allocation1 + $0x10] sm:$0xff pattern:$0x75316420]
      %703 = vrot.lane.b32.xlu0 %v700, 92
      %v704 = vpop.permute.xlu0 %703
      %705 = vrot.lane.b32.xlu0 %v701, 92
      %v706 = vpop.permute.xlu0 %705
      %707 = vrot.lane.b32.xlu0 %v702, 92
      %v708 = vpop.permute.xlu0 %707
      %vm709 = vcmask 752640
      %v710 = vsel %vm709, %v704, %v706
      %v711 = vsel %vm709, %v706, %v708
      %v713 = vsel %vm193, %v696, 0
      %v715 = vsel %vm197, %v710, 0
      %v717 = vsel %vm197, %v711, 0
      %v719 = vsel %vm197, %v708, 0
      %721 = vmatpush.msra.mxu0 0.0
      %722 = vmatpush.msra.mxu0 0.0
      %723 = vmatpush.msra.mxu0 0.0
      %724 = vmatpush.msra.mxu0 0.0
      %725 = vmatpush.msra.mxu0 0.0
      %726 = vmatpush.msra.mxu0 0.0
      %727 = vmatpush.msra.mxu0 0.0
      %728 = vmatpush.msra.mxu0 0.0
      %729 = vmatpush.msra.mxu0 0.0
      %730 = vmatpush.msra.mxu0 0.0
      %731 = vmatpush.msra.mxu0 0.0
      %732 = vmatpush.msra.mxu0 0.0
      %733 = vmatpush.msra.mxu0 0.0
      %734 = vmatpush.msra.mxu0 0.0
      %735 = vmatpush.msra.mxu0 0.0
      %736 = vmatpush.msra.mxu0 %v715
      %737 = vmatmul.f32.gmra.mxu0 %v713
      %v738 = vpop.f32.mrf.mxu0
      %v739 = vadd.f32 0.0, %v738
      %740 = vdwg.mxu0
      %741 = vmatpush.msra.mxu0 0.0
      %742 = vmatpush.msra.mxu0 0.0
      %743 = vmatpush.msra.mxu0 0.0
      %744 = vmatpush.msra.mxu0 0.0
      %745 = vmatpush.msra.mxu0 0.0
      %746 = vmatpush.msra.mxu0 0.0
      %747 = vmatpush.msra.mxu0 0.0
      %748 = vmatpush.msra.mxu0 0.0
      %749 = vmatpush.msra.mxu0 0.0
      %750 = vmatpush.msra.mxu0 0.0
      %751 = vmatpush.msra.mxu0 0.0
      %752 = vmatpush.msra.mxu0 0.0
      %753 = vmatpush.msra.mxu0 0.0
      %754 = vmatpush.msra.mxu0 0.0
      %755 = vmatpush.msra.mxu0 0.0
      %756 = vmatpush.msra.mxu0 %v717
      %757 = vmatmul.f32.gmra.mxu0 %v713
      %v758 = vpop.f32.mrf.mxu0
      %v759 = vadd.f32 0.0, %v758
      %760 = vdwg.mxu0
      %761 = vmatpush.msra.mxu0 0.0
      %762 = vmatpush.msra.mxu0 0.0
      %763 = vmatpush.msra.mxu0 0.0
      %764 = vmatpush.msra.mxu0 0.0
      %765 = vmatpush.msra.mxu0 0.0
      %766 = vmatpush.msra.mxu0 0.0
      %767 = vmatpush.msra.mxu0 0.0
      %768 = vmatpush.msra.mxu0 0.0
      %769 = vmatpush.msra.mxu0 0.0
      %770 = vmatpush.msra.mxu0 0.0
      %771 = vmatpush.msra.mxu0 0.0
      %772 = vmatpush.msra.mxu0 0.0
      %773 = vmatpush.msra.mxu0 0.0
      %774 = vmatpush.msra.mxu0 0.0
      %775 = vmatpush.msra.mxu0 0.0
      %776 = vmatpush.msra.mxu0 %v719
      %777 = vmatmul.f32.gmra.mxu0 %v713
      %v778 = vpop.f32.mrf.mxu0
      %v779 = vadd.f32 0.0, %v778
      %780 = vdwg.mxu0
      %v781 = vadd.f32 %v692, %v739
      %v782 = vadd.f32 %v693, %v759
      %v783 = vadd.f32 %v694, %v779
      %s784 = scalar_lea.vmem %s1, 28
      %v785 = vld [vmem:[%s784] sm:$0xf]
      %786 = vst [vmem:[#allocation1] ss:$2 sm:$0xff] %v171
      %s787 = scalar_lea.vmem [#allocation1], 16
      %788 = vst [vmem:[%s787] ss:$2 sm:$0xff] %v172
      %v789 = vld.sshfl [vmem:[#allocation1] sm:$0xff pattern:$0x75316420]
      %v790 = vld.sshfl [vmem:[#allocation1 + $0x8] sm:$0xff pattern:$0x75316420]
      %v791 = vld.sshfl [vmem:[#allocation1 + $0x10] sm:$0xff pattern:$0x75316420]
      %792 = vrot.lane.b32.xlu0 %v789, 91
      %v793 = vpop.permute.xlu0 %792
      %794 = vrot.lane.b32.xlu0 %v790, 91
      %v795 = vpop.permute.xlu0 %794
      %796 = vrot.lane.b32.xlu0 %v791, 91
      %v797 = vpop.permute.xlu0 %796
      %vm798 = vcmask 744448
      %v799 = vsel %vm798, %v793, %v795
      %v800 = vsel %vm798, %v795, %v797
      %v802 = vsel %vm193, %v785, 0
      %v804 = vsel %vm197, %v799, 0
      %v806 = vsel %vm197, %v800, 0
      %v808 = vsel %vm197, %v797, 0
      %810 = vmatpush.msra.mxu0 0.0
      %811 = vmatpush.msra.mxu0 0.0
      %812 = vmatpush.msra.mxu0 0.0
      %813 = vmatpush.msra.mxu0 0.0
      %814 = vmatpush.msra.mxu0 0.0
      %815 = vmatpush.msra.mxu0 0.0
      %816 = vmatpush.msra.mxu0 0.0
      %817 = vmatpush.msra.mxu0 0.0
      %818 = vmatpush.msra.mxu0 0.0
      %819 = vmatpush.msra.mxu0 0.0
      %820 = vmatpush.msra.mxu0 0.0
      %821 = vmatpush.msra.mxu0 0.0
      %822 = vmatpush.msra.mxu0 0.0
      %823 = vmatpush.msra.mxu0 0.0
      %824 = vmatpush.msra.mxu0 0.0
      %825 = vmatpush.msra.mxu0 %v804
      %826 = vmatmul.f32.gmra.mxu0 %v802
      %v827 = vpop.f32.mrf.mxu0
      %v828 = vadd.f32 0.0, %v827
      %829 = vdwg.mxu0
      %830 = vmatpush.msra.mxu0 0.0
      %831 = vmatpush.msra.mxu0 0.0
      %832 = vmatpush.msra.mxu0 0.0
      %833 = vmatpush.msra.mxu0 0.0
      %834 = vmatpush.msra.mxu0 0.0
      %835 = vmatpush.msra.mxu0 0.0
      %836 = vmatpush.msra.mxu0 0.0
      %837 = vmatpush.msra.mxu0 0.0
      %838 = vmatpush.msra.mxu0 0.0
      %839 = vmatpush.msra.mxu0 0.0
      %840 = vmatpush.msra.mxu0 0.0
      %841 = vmatpush.msra.mxu0 0.0
      %842 = vmatpush.msra.mxu0 0.0
      %843 = vmatpush.msra.mxu0 0.0
      %844 = vmatpush.msra.mxu0 0.0
      %845 = vmatpush.msra.mxu0 %v806
      %846 = vmatmul.f32.gmra.mxu0 %v802
      %v847 = vpop.f32.mrf.mxu0
      %v848 = vadd.f32 0.0, %v847
      %849 = vdwg.mxu0
      %850 = vmatpush.msra.mxu0 0.0
      %851 = vmatpush.msra.mxu0 0.0
      %852 = vmatpush.msra.mxu0 0.0
      %853 = vmatpush.msra.mxu0 0.0
      %854 = vmatpush.msra.mxu0 0.0
      %855 = vmatpush.msra.mxu0 0.0
      %856 = vmatpush.msra.mxu0 0.0
      %857 = vmatpush.msra.mxu0 0.0
      %858 = vmatpush.msra.mxu0 0.0
      %859 = vmatpush.msra.mxu0 0.0
      %860 = vmatpush.msra.mxu0 0.0
      %861 = vmatpush.msra.mxu0 0.0
      %862 = vmatpush.msra.mxu0 0.0
      %863 = vmatpush.msra.mxu0 0.0
      %864 = vmatpush.msra.mxu0 0.0
      %865 = vmatpush.msra.mxu0 %v808
      %866 = vmatmul.f32.gmra.mxu0 %v802
      %v867 = vpop.f32.mrf.mxu0
      %v868 = vadd.f32 0.0, %v867
      %869 = vdwg.mxu0
      %v870 = vadd.f32 %v781, %v828
      %v871 = vadd.f32 %v782, %v848
      %v872 = vadd.f32 %v783, %v868
      %s873 = scalar_lea.vmem %s1, 32
      %v874 = vld [vmem:[%s873] sm:$0xf]
      %875 = vst [vmem:[#allocation1] ss:$2 sm:$0xff] %v171
      %s876 = scalar_lea.vmem [#allocation1], 16
      %877 = vst [vmem:[%s876] ss:$2 sm:$0xff] %v172
      %v878 = vld.sshfl [vmem:[#allocation1] sm:$0xff pattern:$0x75316420]
      %v879 = vld.sshfl [vmem:[#allocation1 + $0x8] sm:$0xff pattern:$0x75316420]
      %v880 = vld.sshfl [vmem:[#allocation1 + $0x10] sm:$0xff pattern:$0x75316420]
      %881 = vrot.lane.b32.xlu0 %v878, 90
      %v882 = vpop.permute.xlu0 %881
      %883 = vrot.lane.b32.xlu0 %v879, 90
      %v884 = vpop.permute.xlu0 %883
      %885 = vrot.lane.b32.xlu0 %v880, 90
      %v886 = vpop.permute.xlu0 %885
      %vm887 = vcmask 736256
      %v888 = vsel %vm887, %v882, %v884
      %v889 = vsel %vm887, %v884, %v886
      %v891 = vsel %vm193, %v874, 0
      %v893 = vsel %vm197, %v888, 0
      %v895 = vsel %vm197, %v889, 0
      %v897 = vsel %vm197, %v886, 0
      %899 = vmatpush.msra.mxu0 0.0
      %900 = vmatpush.msra.mxu0 0.0
      %901 = vmatpush.msra.mxu0 0.0
      %902 = vmatpush.msra.mxu0 0.0
      %903 = vmatpush.msra.mxu0 0.0
      %904 = vmatpush.msra.mxu0 0.0
      %905 = vmatpush.msra.mxu0 0.0
      %906 = vmatpush.msra.mxu0 0.0
      %907 = vmatpush.msra.mxu0 0.0
      %908 = vmatpush.msra.mxu0 0.0
      %909 = vmatpush.msra.mxu0 0.0
      %910 = vmatpush.msra.mxu0 0.0
      %911 = vmatpush.msra.mxu0 0.0
      %912 = vmatpush.msra.mxu0 0.0
      %913 = vmatpush.msra.mxu0 0.0
      %914 = vmatpush.msra.mxu0 %v893
      %915 = vmatmul.f32.gmra.mxu0 %v891
      %v916 = vpop.f32.mrf.mxu0
      %v917 = vadd.f32 0.0, %v916
      %918 = vdwg.mxu0
      %919 = vmatpush.msra.mxu0 0.0
      %920 = vmatpush.msra.mxu0 0.0
      %921 = vmatpush.msra.mxu0 0.0
      %922 = vmatpush.msra.mxu0 0.0
      %923 = vmatpush.msra.mxu0 0.0
      %924 = vmatpush.msra.mxu0 0.0
      %925 = vmatpush.msra.mxu0 0.0
      %926 = vmatpush.msra.mxu0 0.0
      %927 = vmatpush.msra.mxu0 0.0
      %928 = vmatpush.msra.mxu0 0.0
      %929 = vmatpush.msra.mxu0 0.0
      %930 = vmatpush.msra.mxu0 0.0
      %931 = vmatpush.msra.mxu0 0.0
      %932 = vmatpush.msra.mxu0 0.0
      %933 = vmatpush.msra.mxu0 0.0
      %934 = vmatpush.msra.mxu0 %v895
      %935 = vmatmul.f32.gmra.mxu0 %v891
      %v936 = vpop.f32.mrf.mxu0
      %v937 = vadd.f32 0.0, %v936
      %938 = vdwg.mxu0
      %939 = vmatpush.msra.mxu0 0.0
      %940 = vmatpush.msra.mxu0 0.0
      %941 = vmatpush.msra.mxu0 0.0
      %942 = vmatpush.msra.mxu0 0.0
      %943 = vmatpush.msra.mxu0 0.0
      %944 = vmatpush.msra.mxu0 0.0
      %945 = vmatpush.msra.mxu0 0.0
      %946 = vmatpush.msra.mxu0 0.0
      %947 = vmatpush.msra.mxu0 0.0
      %948 = vmatpush.msra.mxu0 0.0
      %949 = vmatpush.msra.mxu0 0.0
      %950 = vmatpush.msra.mxu0 0.0
      %951 = vmatpush.msra.mxu0 0.0
      %952 = vmatpush.msra.mxu0 0.0
      %953 = vmatpush.msra.mxu0 0.0
      %954 = vmatpush.msra.mxu0 %v897
      %955 = vmatmul.f32.gmra.mxu0 %v891
      %v956 = vpop.f32.mrf.mxu0
      %v957 = vadd.f32 0.0, %v956
      %958 = vdwg.mxu0
      %v959 = vadd.f32 %v870, %v917
      %v960 = vadd.f32 %v871, %v937
      %v961 = vadd.f32 %v872, %v957
      %v962 = vld [vmem:[%s2] sm:$0xf]
      %964 = vset.pattern.permute.xlu0 0
      %965 = vperm.xlu0 %964, %v962
      %v966 = vpop.permute.xlu0 %965
      %v968 = vadd.f32 %v959, %v966
      %v969 = vadd.f32 %v960, %v966
      %v970 = vadd.f32 %v961, %v966
      %v971 = vxor.u32 %v968, 2147483648
      %v972 = vxor.u32 %v969, 2147483648
      %v973 = vxor.u32 %v970, 2147483648
      %v974 = vmul.f32 %v971, 1.442695
      %v975 = vpow.pop %v974
      %v976 = vmul.f32 %v972, 1.442695
      %v977 = vpow.pop %v976
      %v978 = vmul.f32 %v973, 1.442695
      %v979 = vpow.pop %v978
      %v980 = vadd.f32 %v975, 1.0
      %v981 = vadd.f32 %v977, 1.0
      %v982 = vadd.f32 %v979, 1.0
      %v983 = vrcp.pop %v980
      %v984 = vmul.f32 %v980, %v983
      %v985 = vsub.f32 1.0, %v984
      %v986 = vmul.f32 %v983, %v985
      %v987 = vadd.f32 %v983, %v986
      %vm988 = vweird.f32 %v980
      %vm989 = vweird.f32 %v983
      %vm990 = vmor %vm988, %vm989
      %v991 = vsel %vm990, %v983, %v987
      %v992 = vand.u32 2147483647, %v980
      %vm993 = vcmp.eq.f32.partialorder %v992, 8.507059e+37
      %v994 = vand.u32 %v980, 2147483648
      %v995 = vor.u32 1.1754944e-38, %v994
      %v996 = vsel %vm993, %v995, %v991
      %v997 = vmul.f32 1.0, %v996
      %v998 = vrcp.pop %v981
      %v999 = vmul.f32 %v981, %v998
      %v1000 = vsub.f32 1.0, %v999
      %v1001 = vmul.f32 %v998, %v1000
      %v1002 = vadd.f32 %v998, %v1001
      %vm1003 = vweird.f32 %v981
      %vm1004 = vweird.f32 %v998
      %vm1005 = vmor %vm1003, %vm1004
      %v1006 = vsel %vm1005, %v998, %v1002
      %v1007 = vand.u32 2147483647, %v981
      %vm1008 = vcmp.eq.f32.partialorder %v1007, 8.507059e+37
      %v1009 = vand.u32 %v981, 2147483648
      %v1010 = vor.u32 1.1754944e-38, %v1009
      %v1011 = vsel %vm1008, %v1010, %v1006
      %v1012 = vmul.f32 1.0, %v1011
      %v1013 = vrcp.pop %v982
      %v1014 = vmul.f32 %v982, %v1013
      %v1015 = vsub.f32 1.0, %v1014
      %v1016 = vmul.f32 %v1013, %v1015
      %v1017 = vadd.f32 %v1013, %v1016
      %vm1018 = vweird.f32 %v982
      %vm1019 = vweird.f32 %v1013
      %vm1020 = vmor %vm1018, %vm1019
      %v1021 = vsel %vm1020, %v1013, %v1017
      %v1022 = vand.u32 2147483647, %v982
      %vm1023 = vcmp.eq.f32.partialorder %v1022, 8.507059e+37
      %v1024 = vand.u32 %v982, 2147483648
      %v1025 = vor.u32 1.1754944e-38, %v1024
      %v1026 = vsel %vm1023, %v1025, %v1021
      %v1027 = vmul.f32 1.0, %v1026
      %v1031 = vrot.slane %v1012, 7
      %v1032 = vrot.slane %v1027, 6
      %vm1033 = vcmask 1040384
      %v1034 = vsel %vm1033, %v997, %v1031
      %vm1035 = vcmask 1041408
      %v1036 = vsel %vm1035, %v1034, %v1032
      %v1038 = vlaneseq
      %vm1039 = vcmp.ge.s32.totalorder %v1038, 0
      %vm1040 = vcmp.lt.s32.totalorder %v1038, 288
      %vm1041 = vmand %vm1039, %vm1040
      %1042 = vst.msk [vmem:[%s170] ss:$4 sm:$0x7] %vm1041, %v1036
      %v1043 = vtanh.pop %v968
      %v1044 = vtanh.pop %v969
      %v1045 = vtanh.pop %v970
      %1049 = vst [vmem:[#allocation1] sm:$0xff] %v1043
      %1050 = vst [vmem:[#allocation1 + $0x9] sm:$0xff] %v1044
      %1051 = vst [vmem:[#allocation1 + $0x12] sm:$0xff] %v1045
      %s1052 = scalar_lea.vmem [#allocation1], 1
      %v1053 = vld [vmem:[%s1052] ss:$9 sm:$0xff]
      %s1055 = scalar_lea.vmem %s170, 1
      %1056 = vst.msk [vmem:[%s1055] ss:$4 sm:$0x7] %vm1041, %v1053
      %1060 = vst [vmem:[#allocation1] sm:$0xff] %v968
      %1061 = vst [vmem:[#allocation1 + $0x9] sm:$0xff] %v969
      %1062 = vst [vmem:[#allocation1 + $0x12] sm:$0xff] %v970
      %s1063 = scalar_lea.vmem [#allocation1], 2
      %v1064 = vld [vmem:[%s1063] ss:$9 sm:$0xff]
      %s1066 = scalar_lea.vmem %s170, 2
      %1067 = vst.msk [vmem:[%s1066] ss:$4 sm:$0x7] %vm1041, %v1064
      %v1068 = vmax.f32 %v968, 0.0
      %v1069 = vmax.f32 %v969, 0.0
      %v1070 = vmax.f32 %v970, 0.0
      %1074 = vst [vmem:[#allocation1] sm:$0xff] %v1068
      %1075 = vst [vmem:[#allocation1 + $0x9] sm:$0xff] %v1069
      %1076 = vst [vmem:[#allocation1 + $0x12] sm:$0xff] %v1070
      %s1077 = scalar_lea.vmem [#allocation1], 3
      %v1078 = vld [vmem:[%s1077] ss:$9 sm:$0xff]
      %s1080 = scalar_lea.vmem %s170, 3
      %1081 = vst.msk [vmem:[%s1080] ss:$4 sm:$0x7] %vm1041, %v1078
      %p1082 = scmp.lt.s32.totalorder %s14, 1
      %s1083 = scalar_select %p1082, %s14, 1
      %s1084 = smul.addr %s1083, 3
      %s1085 = smul.addr %s1084, 4
      %s1086 = scalar_lea.vmem %s3, %s1085
      // Predicated region
      $region33: #{generic_forward.1} parent=31 // pred_check
        %p1087 = pneg %p100
      $region34: #{generic_forward.1} parent=31 // pred_check_branch
        %1089 = sbr.rel (%p1087) target = $region36
      $region35: #{generic_forward.1} parent=31 // pred_region
        _
      $region36: #{generic_forward.1} parent=31 // pred_fallthru
        _
    $region32: #{generic_forward.1} parent=5 // pred_fallthru
      _
    %p1090 = scmp.le.s32.totalorder 2, %s9
    // Predicated region
    $region37: #{generic_forward.1} parent=5 // pred_check
      %p1091 = pneg %p1090
    $region38: #{generic_forward.1} parent=5 // pred_check_branch
      %1093 = sbr.rel (%p1091) target = $region40
    $region39: #{generic_forward.1} parent=5 // pred_region
      %s1094 = ssub.s32 %s9, 2
      // Predicated region
      $region41: #{generic_forward.1} parent=39 // pred_check
        %p1095 = pneg %p106
      $region42: #{generic_forward.1} parent=39 // pred_check_branch
        %1097 = sbr.rel (%p1095) target = $region44
      $region43: #{generic_forward.1} parent=39 // pred_region
        %p1098 = scmp.lt.s32.totalorder %s15, 1
        %s1099 = scalar_select %p1098, %s15, 1
        %s1100 = smul.addr %s1099, 3
        %s1101 = smul.addr %s1100, 4
        %s1102 = scalar_lea.vmem %s3, %s1101
      $region44: #{generic_forward.1} parent=39 // pred_fallthru
        _
    $region40: #{generic_forward.1} parent=5 // pred_fallthru
      _
  $region6: #{generic_forward.1} parent=0 // loop_footer
    %s13 = sadd.s32 1, %s9
  $region7: #{generic_forward.1} parent=0 // loop_footer_branch
    %8 = sbr.rel target = $region3
  $region8: #{generic_forward.1} parent=0 // loop_exit
    _

</llo_original>
